<compile_context>
chip_gen: v6e
topology: v6e:2x2x1
jax: 0.10.0
libtpu: 0.0.40
codegen_flags: <defaults>
</compile_context>

<pallas_src>
import functools

import jax
import jax.numpy as jnp
from jax import lax
from jax.experimental import pallas as pl
from jax.experimental.pallas import tpu as pltpu

EPS = 1e-5
LANE = 128
VMEM_LIMIT_BYTES = 48 * 1024 * 1024


def _round_channels(c):
    # lane-dense always; prefer 256-multiples once channels reach the 256-wide MXU.
    m = 256 if c >= 256 else LANE
    return (c + m - 1) // m * m


def _full_spec(shape):
    nd = len(shape)
    return pl.BlockSpec(shape, lambda i, nd=nd: (0,) * nd)


def _tile_spec(tb, rows, cols):
    return pl.BlockSpec((tb, rows, cols), lambda i: (i, 0, 0))


def _mm(a3, w2d):
    """(TB, R, K) @ (K, C) on the MXU with f32 accumulation -> (TB, R, C)."""
    tb, r, k = a3.shape
    y = lax.dot_general(a3.reshape(tb * r, k), w2d, (((1,), (0,)), ((), ())),
                        preferred_element_type=jnp.float32)
    return y.reshape(tb, r, w2d.shape[1])


def _shift_down(a):   # a[:, l-1, :] with a zero row at l == 0
    return jnp.concatenate([jnp.zeros_like(a[:, :1, :]), a[:, :-1, :]], axis=1)


def _shift_up(a):     # a[:, l+1, :] with a zero row at l == last
    return jnp.concatenate([a[:, 1:, :], jnp.zeros_like(a[:, :1, :])], axis=1)


def _partial_stats(y):
    """Per-channel (sum, sumsq) over this tile -> (1, 2, C) f32."""
    s = jnp.sum(y, axis=(0, 1), keepdims=True)
    ss = jnp.sum(y * y, axis=(0, 1), keepdims=True)
    return jnp.concatenate([s, ss], axis=1)


# ---------------- pass A: conv1 (+ optional 1x1 shortcut) + BN1 partial stats -------
def _pass_a_kernel(*refs, stride, use_1x1):
    if stride == 2:
        xc_ref, xo_ref, *rest = refs       # xc = x[2o] (center tap), xo = x[2o+1]
    else:
        xc_ref, *rest = refs               # xc = x[o]
        xo_ref = None
    if use_1x1:
        w1_ref, b1_ref, w3_ref, b3_ref, y1_ref, res_ref, st_ref = rest
    else:
        w1_ref, b1_ref, y1_ref, st_ref = rest

    xc = xc_ref[...]                                      # (TB, Lout, Cinp) bf16
    if stride == 2:
        xo = xo_ref[...]
        y = _mm(xc, w1_ref[1])                            # center tap  x[2o]
        y += _mm(xo, w1_ref[2])                           # +1 tap      x[2o+1]
        y += _mm(_shift_down(xo), w1_ref[0])              # -1 tap      x[2o-1]
    else:
        y = _mm(xc, w1_ref[1])
        y += _mm(_shift_down(xc), w1_ref[0])
        y += _mm(_shift_up(xc), w1_ref[2])
    y += b1_ref[...]                                      # f32 from here on

    st_ref[...] = _partial_stats(y)                       # BN1 partial sums
    y1_ref[...] = y.astype(y1_ref.dtype)

    if use_1x1:                                           # 1x1 shortcut reuses center tap
        res = _mm(xc, w3_ref[...]) + b3_ref[...]
        res_ref[...] = res.astype(res_ref.dtype)


# ---------------- pass B: BN1 apply + ReLU + conv2 + BN2 partial stats --------------
def _pass_b_kernel(y1_ref, s1_ref, h1_ref, w2_ref, b2_ref, z1_ref, st_ref):
    y = jnp.maximum(y1_ref[...].astype(jnp.float32) * s1_ref[...] + h1_ref[...], 0.0)
    yb = y.astype(jnp.bfloat16)                           # matmul operand only
    z = _mm(yb, w2_ref[1])
    z += _mm(_shift_down(yb), w2_ref[0])
    z += _mm(_shift_up(yb), w2_ref[2])
    z += b2_ref[...]
    st_ref[...] = _partial_stats(z)                       # BN2 partial sums
    z1_ref[...] = z.astype(z1_ref.dtype)


# ---------------- pass C: BN2 apply + shortcut add + ReLU ---------------------------
def _pass_c_kernel(z1_ref, res_ref, s2_ref, h2_ref, o_ref):
    z = z1_ref[...].astype(jnp.float32) * s2_ref[...] + h2_ref[...]
    o = jnp.maximum(z + res_ref[...].astype(jnp.float32), 0.0)
    o_ref[...] = o.astype(o_ref.dtype)                    # lane-dense bf16 store


def _bn_scale_shift(stats, gamma, beta, count):
    tot = jnp.sum(stats, axis=0)                          # (2, Cp) tiny XLA reduce
    mean = tot[0] / count
    var = jnp.maximum(tot[1] / count - mean * mean, 0.0)  # guard negative variance
    scale = gamma * lax.rsqrt(var + EPS)                  # (1, Cp)
    shift = beta - mean * scale
    return scale, shift


def residual_forward(x_ncl, params, *, stride, use_1x1conv, batch_tile=1):
    """x_ncl: (N, C_in, L) like PyTorch. Returns (N, C_out, L_out) float32."""
    assert stride in (1, 2)
    x = jnp.transpose(x_ncl, (0, 2, 1)).astype(jnp.float32)   # NCL -> NLC
    N, L, Cin = x.shape
    Cout = params["w1"].shape[2]
    Lout = (L - 1) // stride + 1
    if not use_1x1conv:
        assert Cin == Cout and stride == 1, \
            "identity shortcut needs input_channels == num_channels and stride == 1"
    TB = batch_tile
    assert N % TB == 0
    nt = N // TB

    Cinp = _round_channels(Cin)
    Cp = _round_channels(Cout)
    f32, bf16 = jnp.float32, jnp.bfloat16

    def padv(v):                                          # (1, Cout) -> (1, Cp) f32
        return jnp.pad(v.astype(f32), ((0, 0), (0, Cp - Cout)))

    # Lane-dense bf16 activations.  Stride 2 is de-interleaved once (no duplication)
    # so the kernel never needs strided loads.
    xpad = jnp.pad(x, ((0, 0), (0, 0), (0, Cinp - Cin))).astype(bf16)
    if stride == 1:
        x_inputs = [xpad]
    else:
        xe = xpad[:, 0::2, :][:, :Lout, :]                # x[2o]   (center tap)
        xo = xpad[:, 1::2, :]                             # x[2o+1]
        if xo.shape[1] < Lout:
            xo = jnp.pad(xo, ((0, 0), (0, Lout - xo.shape[1]), (0, 0)))
        x_inputs = [xe, xo]

    w1p = jnp.zeros((3, Cinp, Cp), f32).at[:, :Cin, :Cout].set(params["w1"]).astype(bf16)
    w2p = jnp.zeros((3, Cp, Cp), f32).at[:, :Cout, :Cout].set(params["w2"]).astype(bf16)
    b1p, b2p = padv(params["b1"]), padv(params["b2"])

    cparams = pltpu.CompilerParams(dimension_semantics=("parallel",),
                                   vmem_limit_bytes=VMEM_LIMIT_BYTES)

    # ---- pass A: conv1 (+ shortcut) + BN1 partial stats -----------------------------
    a_in = list(x_inputs) + [w1p, b1p]
    a_specs = [_tile_spec(TB, xi.shape[1], Cinp) for xi in x_inputs] \
              + [_full_spec(w1p.shape), _full_spec(b1p.shape)]
    a_out_shape = [jax.ShapeDtypeStruct((N, Lout, Cp), bf16)]
    a_out_specs = [_tile_spec(TB, Lout, Cp)]
    if use_1x1conv:
        w3p = jnp.zeros((Cinp, Cp), f32).at[:Cin, :Cout].set(params["w3"]).astype(bf16)
        a_in += [w3p, padv(params["b3"])]
        a_specs += [_full_spec(w3p.shape), _full_spec((1, Cp))]
        a_out_shape.append(jax.ShapeDtypeStruct((N, Lout, Cp), bf16))
        a_out_specs.append(_tile_spec(TB, Lout, Cp))
    a_out_shape.append(jax.ShapeDtypeStruct((nt, 2, Cp), f32))
    a_out_specs.append(_tile_spec(1, 2, Cp))

    outs_a = pl.pallas_call(
        functools.partial(_pass_a_kernel, stride=stride, use_1x1=use_1x1conv),
        grid=(nt,), in_specs=a_specs, out_specs=tuple(a_out_specs),
        out_shape=tuple(a_out_shape), compiler_params=cparams,
    )(*a_in)
    if use_1x1conv:
        y1, res, st1 = outs_a
    else:
        y1, st1 = outs_a
        res = xpad                       # identity shortcut: Cinp == Cp, L == Lout

    s1, h1 = _bn_scale_shift(st1, padv(params["g1"]), padv(params["be1"]), N * Lout)

    # ---- pass B: BN1 + ReLU + conv2 + BN2 partial stats -----------------------------
    z1, st2 = pl.pallas_call(
        _pass_b_kernel, grid=(nt,),
        in_specs=[_tile_spec(TB, Lout, Cp), _full_spec((1, Cp)), _full_spec((1, Cp)),
                  _full_spec(w2p.shape), _full_spec((1, Cp))],
        out_specs=(_tile_spec(TB, Lout, Cp), _tile_spec(1, 2, Cp)),
        out_shape=(jax.ShapeDtypeStruct((N, Lout, Cp), bf16),
                   jax.ShapeDtypeStruct((nt, 2, Cp), f32)),
        compiler_params=cparams,
    )(y1, s1, h1, w2p, b2p)

    s2, h2 = _bn_scale_shift(st2, padv(params["g2"]), padv(params["be2"]), N * Lout)

    # ---- pass C: BN2 + shortcut add + ReLU -------------------------------------------
    out = pl.pallas_call(
        _pass_c_kernel, grid=(nt,),
        in_specs=[_tile_spec(TB, Lout, Cp), _tile_spec(TB, Lout, Cp),
                  _full_spec((1, Cp)), _full_spec((1, Cp))],
        out_specs=_tile_spec(TB, Lout, Cp),
        out_shape=jax.ShapeDtypeStruct((N, Lout, Cp), bf16),
        compiler_params=cparams,
    )(z1, res, s2, h2)

    return jnp.transpose(out[:, :, :Cout].astype(f32), (0, 2, 1))   # NLC -> NCL


def init_params(key, cin, cout):
    """Deterministic synthetic parameters. Conv weights stored as (K, C_in, C_out)."""
    k1, k2, k3 = jax.random.split(key, 3)
    f32 = jnp.float32
    return {
        "w1": 0.2 * jax.random.normal(k1, (3, cin, cout), f32),
        "b1": jnp.linspace(-0.1, 0.1, cout, dtype=f32).reshape(1, cout),
        "g1": (1.0 + 0.05 * jnp.arange(cout, dtype=f32)).reshape(1, cout),
        "be1": (0.02 * jnp.arange(cout, dtype=f32)).reshape(1, cout),
        "w2": 0.2 * jax.random.normal(k2, (3, cout, cout), f32),
        "b2": jnp.linspace(0.1, -0.1, cout, dtype=f32).reshape(1, cout),
        "g2": (1.0 - 0.03 * jnp.arange(cout, dtype=f32)).reshape(1, cout),
        "be2": (-0.01 * jnp.arange(cout, dtype=f32)).reshape(1, cout),
        "w3": 0.2 * jax.random.normal(k3, (cin, cout), f32),
        "b3": (0.03 * jnp.arange(cout, dtype=f32)).reshape(1, cout),
    }


def ref_forward(x_ncl, params, *, stride, use_1x1conv):
    """Pure-JAX reference mirroring the PyTorch forward (train-mode BN), f32."""
    def conv1d(x, w_kico, b, s, p):
        w = jnp.transpose(w_kico, (2, 1, 0))  # (Cout, Cin, K)
        y = lax.conv_general_dilated(x, w, (s,), [(p, p)],
                                     dimension_numbers=("NCH", "OIH", "NCH"),
                                     precision=lax.Precision.HIGHEST)
        return y + b.reshape(1, -1, 1)

    def bn(y, g, b):
        m = y.mean(axis=(0, 2), keepdims=True)
        v = ((y - m) ** 2).mean(axis=(0, 2), keepdims=True)
        return (y - m) * lax.rsqrt(v + EPS) * g.reshape(1, -1, 1) + b.reshape(1, -1, 1)

    Y = jax.nn.relu(bn(conv1d(x_ncl, params["w1"], params["b1"][0], stride, 1),
                       params["g1"][0], params["be1"][0]))
    Y = bn(conv1d(Y, params["w2"], params["b2"][0], 1, 1),
           params["g2"][0], params["be2"][0])
    if use_1x1conv:
        X = conv1d(x_ncl, params["w3"][None], params["b3"][0], stride, 0)
    else:
        X = x_ncl
    return jax.nn.relu(Y + X)


if __name__ == "__main__":
    key = jax.random.PRNGKey(0)
    kx1, kp1, kx2, kp2 = jax.random.split(key, 4)

    # Case 1: Residual(input_channels=4, num_channels=8, use_1x1Conv=True, strides=2)
    N, Cin, L, Cout, stride = 2, 4, 16, 8, 2
    x1 = jax.random.uniform(kx1, (N, Cin, L), jnp.float32)      # PyTorch NCL input
    p1 = init_params(kp1, Cin, Cout)
    out1 = jax.block_until_ready(
        residual_forward(x1, p1, stride=stride, use_1x1conv=True))
    ref1 = ref_forward(x1, p1, stride=stride, use_1x1conv=True)
    assert out1.shape == ref1.shape == (N, Cout, (L - 1) // stride + 1), out1.shape
    err1 = float(jnp.max(jnp.abs(out1 - ref1)))
    assert jnp.allclose(out1, ref1, atol=5e-2, rtol=5e-2), err1

    # Case 2: Residual(8, 8, use_1x1Conv=False, strides=1) — identity shortcut path
    x2 = jax.random.uniform(kx2, (N, 8, L), jnp.float32)
    p2 = init_params(kp2, 8, 8)
    out2 = jax.block_until_ready(
        residual_forward(x2, p2, stride=1, use_1x1conv=False))
    ref2 = ref_forward(x2, p2, stride=1, use_1x1conv=False)
    assert out2.shape == ref2.shape == (N, 8, L), out2.shape
    err2 = float(jnp.max(jnp.abs(out2 - ref2)))
    assert jnp.allclose(out2, ref2, atol=5e-2, rtol=5e-2), err2

    print("KERNEL_OK")
</pallas_src>

<mosaic_0001>
module attributes {stable_mosaic.version = 11 : i64} {
  func.func @_pass_a_kernel(%arg0: i32, %arg1: memref<1x8x128xbf16, #tpu.memory_space<vmem>>, %arg2: memref<1x8x128xbf16, #tpu.memory_space<vmem>>, %arg3: memref<3x128x128xbf16, #tpu.memory_space<vmem>>, %arg4: memref<1x128xf32, #tpu.memory_space<vmem>>, %arg5: memref<128x128xbf16, #tpu.memory_space<vmem>>, %arg6: memref<1x128xf32, #tpu.memory_space<vmem>>, %arg7: memref<1x8x128xbf16, #tpu.memory_space<vmem>>, %arg8: memref<1x8x128xbf16, #tpu.memory_space<vmem>>, %arg9: memref<1x2x128xf32, #tpu.memory_space<vmem>>) attributes {dimension_semantics = [#tpu.dimension_semantics<parallel>], iteration_bounds = array<i64: 2>, scalar_prefetch = 0 : i64, scratch_operands = 0 : i64, tpu.core_type = #tpu.core_type<tc>, window_params = [{transform_indices = @transform_0, window_bounds = array<i64: 1, 8, 128>}, {transform_indices = @transform_1, window_bounds = array<i64: 1, 8, 128>}, {pipeline_mode = #tpu.pipeline_mode<synchronous>, transform_indices = @transform_2, window_bounds = array<i64: 3, 128, 128>}, {pipeline_mode = #tpu.pipeline_mode<synchronous>, transform_indices = @transform_3, window_bounds = array<i64: 1, 128>}, {pipeline_mode = #tpu.pipeline_mode<synchronous>, transform_indices = @transform_4, window_bounds = array<i64: 128, 128>}, {pipeline_mode = #tpu.pipeline_mode<synchronous>, transform_indices = @transform_5, window_bounds = array<i64: 1, 128>}, {transform_indices = @transform_6, window_bounds = array<i64: 1, 8, 128>}, {transform_indices = @transform_7, window_bounds = array<i64: 1, 8, 128>}, {transform_indices = @transform_8, window_bounds = array<i64: 1, 2, 128>}]} {
    %c0 = arith.constant 0 : index
    %c0_0 = arith.constant 0 : index
    %c0_1 = arith.constant 0 : index
    %0 = vector.load %arg1[%c0, %c0_0, %c0_1] : memref<1x8x128xbf16, #tpu.memory_space<vmem>>, vector<1x8x128xbf16>
    %c0_2 = arith.constant 0 : index
    %c0_3 = arith.constant 0 : index
    %c0_4 = arith.constant 0 : index
    %1 = vector.load %arg2[%c0_2, %c0_3, %c0_4] : memref<1x8x128xbf16, #tpu.memory_space<vmem>>, vector<1x8x128xbf16>
    %c1 = arith.constant 1 : index
    %c0_5 = arith.constant 0 : index
    %c0_6 = arith.constant 0 : index
    %2 = vector.load %arg3[%c1, %c0_5, %c0_6] : memref<3x128x128xbf16, #tpu.memory_space<vmem>>, vector<1x128x128xbf16>
    %3 = vector.shape_cast %2 : vector<1x128x128xbf16> to vector<128x128xbf16>
    %4 = vector.shape_cast %0 : vector<1x8x128xbf16> to vector<8x128xbf16>
    %cst = arith.constant dense<0.000000e+00> : vector<8x128xf32>
    %5 = tpu.matmul %4, %3, %cst {dimension_numbers = #tpu.dot_dimension_numbers<[1], [0], [0], [1], [0, 0, 1, 1], [], []>} : vector<8x128xbf16>, vector<128x128xbf16>, vector<8x128xf32> -> vector<8x128xf32>
    %6 = vector.shape_cast %5 : vector<8x128xf32> to vector<1x8x128xf32>
    %c2 = arith.constant 2 : index
    %c0_7 = arith.constant 0 : index
    %c0_8 = arith.constant 0 : index
    %7 = vector.load %arg3[%c2, %c0_7, %c0_8] : memref<3x128x128xbf16, #tpu.memory_space<vmem>>, vector<1x128x128xbf16>
    %8 = vector.shape_cast %7 : vector<1x128x128xbf16> to vector<128x128xbf16>
    %9 = vector.shape_cast %1 : vector<1x8x128xbf16> to vector<8x128xbf16>
    %cst_9 = arith.constant dense<0.000000e+00> : vector<8x128xf32>
    %10 = tpu.matmul %9, %8, %cst_9 {dimension_numbers = #tpu.dot_dimension_numbers<[1], [0], [0], [1], [0, 0, 1, 1], [], []>} : vector<8x128xbf16>, vector<128x128xbf16>, vector<8x128xf32> -> vector<8x128xf32>
    %11 = vector.shape_cast %10 : vector<8x128xf32> to vector<1x8x128xf32>
    %12 = arith.addf %6, %11 : vector<1x8x128xf32>
    %cst_10 = arith.constant 0.000000e+00 : bf16
    %13 = vector.broadcast %cst_10 : bf16 to vector<1x1x128xbf16>
    %14 = vector.extract_strided_slice %1 {offsets = [0, 0, 0], sizes = [1, 7, 128], strides = [1, 1, 1]} : vector<1x8x128xbf16> to vector<1x7x128xbf16>
    %15 = tpu.concatenate %13, %14 in 1 : vector<1x1x128xbf16>, vector<1x7x128xbf16> -> vector<1x8x128xbf16>
    %c0_11 = arith.constant 0 : index
    %c0_12 = arith.constant 0 : index
    %c0_13 = arith.constant 0 : index
    %16 = vector.load %arg3[%c0_11, %c0_12, %c0_13] : memref<3x128x128xbf16, #tpu.memory_space<vmem>>, vector<1x128x128xbf16>
    %17 = vector.shape_cast %16 : vector<1x128x128xbf16> to vector<128x128xbf16>
    %18 = vector.shape_cast %15 : vector<1x8x128xbf16> to vector<8x128xbf16>
    %cst_14 = arith.constant dense<0.000000e+00> : vector<8x128xf32>
    %19 = tpu.matmul %18, %17, %cst_14 {dimension_numbers = #tpu.dot_dimension_numbers<[1], [0], [0], [1], [0, 0, 1, 1], [], []>} : vector<8x128xbf16>, vector<128x128xbf16>, vector<8x128xf32> -> vector<8x128xf32>
    %20 = vector.shape_cast %19 : vector<8x128xf32> to vector<1x8x128xf32>
    %21 = arith.addf %12, %20 : vector<1x8x128xf32>
    %c0_15 = arith.constant 0 : index
    %c0_16 = arith.constant 0 : index
    %22 = vector.load %arg4[%c0_15, %c0_16] : memref<1x128xf32, #tpu.memory_space<vmem>>, vector<1x128xf32>
    %23 = vector.shape_cast %22 : vector<1x128xf32> to vector<1x1x128xf32>
    %24 = vector.broadcast %23 : vector<1x1x128xf32> to vector<1x8x128xf32>
    %25 = arith.addf %21, %24 : vector<1x8x128xf32>
    %cst_17 = arith.constant dense<0.000000e+00> : vector<128xf32>
    %26 = vector.multi_reduction <add>, %25, %cst_17 [0, 1] : vector<1x8x128xf32> to vector<128xf32>
    %27 = vector.shape_cast %26 : vector<128xf32> to vector<1x1x128xf32>
    %28 = arith.mulf %25, %25 : vector<1x8x128xf32>
    %cst_18 = arith.constant dense<0.000000e+00> : vector<128xf32>
    %29 = vector.multi_reduction <add>, %28, %cst_18 [0, 1] : vector<1x8x128xf32> to vector<128xf32>
    %30 = vector.shape_cast %29 : vector<128xf32> to vector<1x1x128xf32>
    %31 = tpu.concatenate %27, %30 in 1 : vector<1x1x128xf32>, vector<1x1x128xf32> -> vector<1x2x128xf32>
    %c0_19 = arith.constant 0 : index
    %c0_20 = arith.constant 0 : index
    %c0_21 = arith.constant 0 : index
    %32 = vector.load %arg9[%c0_19, %c0_20, %c0_21] : memref<1x2x128xf32, #tpu.memory_space<vmem>>, vector<1x2x128xf32>
    tpu.vector_store %arg9[%c0_19, %c0_20, %c0_21], %31 {strides = array<i32>} : memref<1x2x128xf32, #tpu.memory_space<vmem>>, vector<1x2x128xf32>,
    %33 = arith.truncf %25 : vector<1x8x128xf32> to vector<1x8x128xbf16>
    %c0_22 = arith.constant 0 : index
    %c0_23 = arith.constant 0 : index
    %c0_24 = arith.constant 0 : index
    %34 = vector.load %arg7[%c0_22, %c0_23, %c0_24] : memref<1x8x128xbf16, #tpu.memory_space<vmem>>, vector<1x8x128xbf16>
    tpu.vector_store %arg7[%c0_22, %c0_23, %c0_24], %33 {strides = array<i32>} : memref<1x8x128xbf16, #tpu.memory_space<vmem>>, vector<1x8x128xbf16>,
    %c0_25 = arith.constant 0 : index
    %c0_26 = arith.constant 0 : index
    %35 = vector.load %arg5[%c0_25, %c0_26] : memref<128x128xbf16, #tpu.memory_space<vmem>>, vector<128x128xbf16>
    %36 = vector.shape_cast %0 : vector<1x8x128xbf16> to vector<8x128xbf16>
    %cst_27 = arith.constant dense<0.000000e+00> : vector<8x128xf32>
    %37 = tpu.matmul %36, %35, %cst_27 {dimension_numbers = #tpu.dot_dimension_numbers<[1], [0], [0], [1], [0, 0, 1, 1], [], []>} : vector<8x128xbf16>, vector<128x128xbf16>, vector<8x128xf32> -> vector<8x128xf32>
    %38 = vector.shape_cast %37 : vector<8x128xf32> to vector<1x8x128xf32>
    %c0_28 = arith.constant 0 : index
    %c0_29 = arith.constant 0 : index
    %39 = vector.load %arg6[%c0_28, %c0_29] : memref<1x128xf32, #tpu.memory_space<vmem>>, vector<1x128xf32>
    %40 = vector.shape_cast %39 : vector<1x128xf32> to vector<1x1x128xf32>
    %41 = vector.broadcast %40 : vector<1x1x128xf32> to vector<1x8x128xf32>
    %42 = arith.addf %38, %41 : vector<1x8x128xf32>
    %43 = arith.truncf %42 : vector<1x8x128xf32> to vector<1x8x128xbf16>
    %c0_30 = arith.constant 0 : index
    %c0_31 = arith.constant 0 : index
    %c0_32 = arith.constant 0 : index
    %44 = vector.load %arg8[%c0_30, %c0_31, %c0_32] : memref<1x8x128xbf16, #tpu.memory_space<vmem>>, vector<1x8x128xbf16>
    tpu.vector_store %arg8[%c0_30, %c0_31, %c0_32], %43 {strides = array<i32>} : memref<1x8x128xbf16, #tpu.memory_space<vmem>>, vector<1x8x128xbf16>,
    return
  }
  func.func @transform_0(%arg0: i32) -> (i32, i32, i32) {
    %c0_i32 = arith.constant 0 : i32
    %c0_i32_0 = arith.constant 0 : i32
    %c0_i32_1 = arith.constant 0 : i32
    return %arg0, %c0_i32, %c0_i32_0 : i32, i32, i32
  }
  func.func @transform_1(%arg0: i32) -> (i32, i32, i32) {
    %c0_i32 = arith.constant 0 : i32
    %c0_i32_0 = arith.constant 0 : i32
    %c0_i32_1 = arith.constant 0 : i32
    return %arg0, %c0_i32, %c0_i32_0 : i32, i32, i32
  }
  func.func @transform_2(%arg0: i32) -> (i32, i32, i32) {
    %c0_i32 = arith.constant 0 : i32
    %c0_i32_0 = arith.constant 0 : i32
    %c0_i32_1 = arith.constant 0 : i32
    %c0_i32_2 = arith.constant 0 : i32
    return %c0_i32, %c0_i32_0, %c0_i32_1 : i32, i32, i32
  }
  func.func @transform_3(%arg0: i32) -> (i32, i32) {
    %c0_i32 = arith.constant 0 : i32
    %c0_i32_0 = arith.constant 0 : i32
    %c0_i32_1 = arith.constant 0 : i32
    return %c0_i32, %c0_i32_0 : i32, i32
  }
  func.func @transform_4(%arg0: i32) -> (i32, i32) {
    %c0_i32 = arith.constant 0 : i32
    %c0_i32_0 = arith.constant 0 : i32
    %c0_i32_1 = arith.constant 0 : i32
    return %c0_i32, %c0_i32_0 : i32, i32
  }
  func.func @transform_5(%arg0: i32) -> (i32, i32) {
    %c0_i32 = arith.constant 0 : i32
    %c0_i32_0 = arith.constant 0 : i32
    %c0_i32_1 = arith.constant 0 : i32
    return %c0_i32, %c0_i32_0 : i32, i32
  }
  func.func @transform_6(%arg0: i32) -> (i32, i32, i32) {
    %c0_i32 = arith.constant 0 : i32
    %c0_i32_0 = arith.constant 0 : i32
    %c0_i32_1 = arith.constant 0 : i32
    return %arg0, %c0_i32, %c0_i32_0 : i32, i32, i32
  }
  func.func @transform_7(%arg0: i32) -> (i32, i32, i32) {
    %c0_i32 = arith.constant 0 : i32
    %c0_i32_0 = arith.constant 0 : i32
    %c0_i32_1 = arith.constant 0 : i32
    return %arg0, %c0_i32, %c0_i32_0 : i32, i32, i32
  }
  func.func @transform_8(%arg0: i32) -> (i32, i32, i32) {
    %c0_i32 = arith.constant 0 : i32
    %c0_i32_0 = arith.constant 0 : i32
    %c0_i32_1 = arith.constant 0 : i32
    return %arg0, %c0_i32, %c0_i32_0 : i32, i32, i32
  }
}

</mosaic_0001>

<llo_original>
// kernel: tpu_custom_call.1
$region0: #{tpu_custom_call.1}
  #allocation0 [shape = 'u32[]', space=smem, size = 0x4, offset = 0x4, fixed_abs, tag = 'smem constant byte address 0x4 - core index']
  #allocation1 [shape = 'u32[144,128]{1,0:T(1,128)}', space=vmem, size = 0x12000, scoped, tag = 'internal scratch']
  %s0 = inlined_call_operand.hbm [shape: bf16[2,8,128], index: 0, kind: input, shape index: {}]
  %s1 = inlined_call_operand.hbm [shape: bf16[2,8,128], index: 1, kind: input, shape index: {}]
  %s2 = inlined_call_operand.hbm [shape: bf16[3,128,128], index: 2, kind: input, shape index: {}]
  %s3 = inlined_call_operand.vmem [shape: f32[1,128], index: 3, kind: input, shape index: {}]
  %s4 = inlined_call_operand.hbm [shape: bf16[128,128], index: 4, kind: input, shape index: {}]
  %s5 = inlined_call_operand.vmem [shape: f32[1,128], index: 5, kind: input, shape index: {}]
  %s6 = inlined_call_operand.hbm [shape: bf16[2,8,128], index: 6, kind: output, shape index: {0}]
  %s7 = inlined_call_operand.hbm [shape: bf16[2,8,128], index: 7, kind: output, shape index: {1}]
  %s8 = inlined_call_operand.hbm [shape: f32[2,2,128], index: 8, kind: output, shape index: {2}]
  %9 = xla_tuple %s6, %s7, %s8
  %s10 = sld [smem:[#allocation0]]
  $region89: #{tpu_custom_call.1} parent=0
    _
  %s12 = ssub.s32 1, %s10
  %s13 = scalar_select 0, %s12, %s10
  $region1: #{tpu_custom_call.1} parent=0
    #allocation2 [shape = 'u8[4096]{0}', space=vmem, size = 0x1000, scoped, tag = 'input window, operand 0']
    #allocation3 [shape = 's32[2]{0}', space=sflag, size = 0x8, scoped, tag = 'scoped memory for tpu_custom_call.1']
    #allocation4 [shape = 's32[2]{0}', space=sflag, size = 0x8, scoped, tag = 'scoped memory for tpu_custom_call.1']
    #allocation5 [shape = 'u8[4096]{0}', space=vmem, size = 0x1000, scoped, tag = 'input window, operand 1']
    #allocation6 [shape = 's32[2]{0}', space=sflag, size = 0x8, scoped, tag = 'scoped memory for tpu_custom_call.1']
    #allocation7 [shape = 'u8[98304]{0}', space=vmem, size = 0x18000, scoped, tag = 'input window, operand 2, single buffered']
    #allocation8 [shape = 'u8[32768]{0}', space=vmem, size = 0x8000, scoped, tag = 'input window, operand 4, single buffered']
    #allocation9 [shape = 's32[1]{0}', space=sflag, size = 0x4, scoped, tag = 'scoped memory for tpu_custom_call.1']
    #allocation10 [shape = 'u8[4096]{0}', space=vmem, size = 0x1000, scoped, tag = 'output window, operand 0']
    #allocation11 [shape = 'u8[4096]{0}', space=vmem, size = 0x1000, scoped, tag = 'output window, operand 1']
    #allocation12 [shape = 's32[2]{0}', space=sflag, size = 0x8, scoped, tag = 'scoped memory for tpu_custom_call.1']
    #allocation13 [shape = 'u8[2048]{0}', space=vmem, size = 0x800, scoped, tag = 'output window, operand 2']
    %14 = vsyncpa [#allocation3], 0
    %s15 = scalar_lea.sflag [#allocation3], 1
    %16 = vsyncpa %s15, 0
    %17 = vsyncpa [#allocation6], 0
    %s18 = scalar_lea.sflag [#allocation6], 1
    %19 = vsyncpa %s18, 0
    %20 = vsyncpa [#allocation9], 0
    %21 = vsyncpa [#allocation4], 0
    %s22 = scalar_lea.sflag [#allocation4], 1
    %23 = vsyncpa %s22, 0
    %24 = vsyncpa [#allocation12], 0
    %s25 = scalar_lea.sflag [#allocation12], 1
    %26 = vsyncpa %s25, 0
    loop: start=0, step=1, limit=4
    $region2: #{tpu_custom_call.1} parent=1 // loop_pre_header
      _
    $region3: #{tpu_custom_call.1} parent=1 // loop_header
      %s28 = sphi 0, %s32
      %p29 = scmp.ge.s32.totalorder %s28, 4
      %s38 = sphi 0, %s40
      %s41 = sphi 0, %s38
      %s42 = sphi 0, %s41
      %s58 = sphi 0, %s42
      %s64 = sphi 0, %s66
      %s67 = sphi 0, %s64
      %s68 = sphi 0, %s67
      %s84 = sphi 0, %s68
      %s88 = sphi 0, %s88
      %s90 = sphi 0, %s88
      %s91 = sphi 0, %s90
      %s105 = sphi 0, %s91
      %s109 = sphi 0, %s109
      %s111 = sphi 0, %s109
      %s112 = sphi 0, %s111
      %s126 = sphi 0, %s112
      %s130 = sphi 0, %s130
      %s132 = sphi 0, %s130
      %s133 = sphi 0, %s132
      %s147 = sphi 0, %s133
      %s151 = sphi 0, %s151
      %s153 = sphi 0, %s151
      %s154 = sphi 0, %s153
      %s168 = sphi 0, %s154
      %s174 = sphi 0, %s176
      %s177 = sphi 0, %s174
      %s178 = sphi 0, %s177
      %s194 = sphi 0, %s178
      %s200 = sphi 0, %s202
      %s203 = sphi 0, %s200
      %s204 = sphi 0, %s203
      %s220 = sphi 0, %s204
      %s226 = sphi 0, %s228
      %s229 = sphi 0, %s226
      %s230 = sphi 0, %s229
      %s246 = sphi 0, %s230
    $region4: #{tpu_custom_call.1} parent=1 // loop_header_branch
      %31 = sbr.rel (%p29) target = $region8
    $region5: #{tpu_custom_call.1} parent=1 // loop_body
      %s33 = ssub.s32 %s28, 1
      %s34 = ssub.s32 %s28, 2
      %s35 = sadd.s32 %s28, 1
      %s36 = ssub.s32 %s28, %s35
      %p37 = scmp.eq.s32.totalorder %s36, 0
      %s39 = sadd.s32 %s38, 1
      %s40 = scalar_select %p37, %s38, %s39
      %p43 = pneg %p37
      %p44 = scmp.eq.s32.totalorder %s28, 1
      %p45 = por %p43, %p44
      %p46 = scmp.ne.s32.totalorder %s38, %s41
      %p47 = scmp.eq.s32.totalorder %s28, 0
      %p48 = por %p46, %p47
      %p49 = scmp.ne.s32.totalorder %s38, %s41
      %p50 = scmp.eq.s32.totalorder %s33, 1
      %p51 = por %p49, %p50
      %p52 = scmp.ne.s32.totalorder %s41, %s42
      %p53 = scmp.eq.s32.totalorder %s33, 0
      %p54 = por %p52, %p53
      %p55 = scmp.ne.s32.totalorder %s41, %s42
      %p56 = scmp.eq.s32.totalorder %s34, 1
      %p57 = por %p55, %p56
      %p59 = scmp.ne.s32.totalorder %s42, %s58
      %p60 = scmp.eq.s32.totalorder %s34, 0
      %p61 = por %p59, %p60
      %s62 = ssub.s32 %s28, %s35
      %p63 = scmp.eq.s32.totalorder %s62, 0
      %s65 = sadd.s32 %s64, 1
      %s66 = scalar_select %p63, %s64, %s65
      %p69 = pneg %p63
      %p70 = scmp.eq.s32.totalorder %s28, 1
      %p71 = por %p69, %p70
      %p72 = scmp.ne.s32.totalorder %s64, %s67
      %p73 = scmp.eq.s32.totalorder %s28, 0
      %p74 = por %p72, %p73
      %p75 = scmp.ne.s32.totalorder %s64, %s67
      %p76 = scmp.eq.s32.totalorder %s33, 1
      %p77 = por %p75, %p76
      %p78 = scmp.ne.s32.totalorder %s67, %s68
      %p79 = scmp.eq.s32.totalorder %s33, 0
      %p80 = por %p78, %p79
      %p81 = scmp.ne.s32.totalorder %s67, %s68
      %p82 = scmp.eq.s32.totalorder %s34, 1
      %p83 = por %p81, %p82
      %p85 = scmp.ne.s32.totalorder %s68, %s84
      %p86 = scmp.eq.s32.totalorder %s34, 0
      %p87 = por %p85, %p86
      %s89 = sadd.s32 %s88, 1
      %p92 = scmp.eq.s32.totalorder %s28, 1
      %p93 = scmp.ne.s32.totalorder %s88, %s90
      %p94 = scmp.eq.s32.totalorder %s28, 0
      %p95 = por %p93, %p94
      %p96 = scmp.ne.s32.totalorder %s88, %s90
      %p97 = scmp.eq.s32.totalorder %s33, 1
      %p98 = por %p96, %p97
      %p99 = scmp.ne.s32.totalorder %s90, %s91
      %p100 = scmp.eq.s32.totalorder %s33, 0
      %p101 = por %p99, %p100
      %p102 = scmp.ne.s32.totalorder %s90, %s91
      %p103 = scmp.eq.s32.totalorder %s34, 1
      %p104 = por %p102, %p103
      %p106 = scmp.ne.s32.totalorder %s91, %s105
      %p107 = scmp.eq.s32.totalorder %s34, 0
      %p108 = por %p106, %p107
      %s110 = sadd.s32 %s109, 1
      %p113 = scmp.eq.s32.totalorder %s28, 1
      %p114 = scmp.ne.s32.totalorder %s109, %s111
      %p115 = scmp.eq.s32.totalorder %s28, 0
      %p116 = por %p114, %p115
      %p117 = scmp.ne.s32.totalorder %s109, %s111
      %p118 = scmp.eq.s32.totalorder %s33, 1
      %p119 = por %p117, %p118
      %p120 = scmp.ne.s32.totalorder %s111, %s112
      %p121 = scmp.eq.s32.totalorder %s33, 0
      %p122 = por %p120, %p121
      %p123 = scmp.ne.s32.totalorder %s111, %s112
      %p124 = scmp.eq.s32.totalorder %s34, 1
      %p125 = por %p123, %p124
      %p127 = scmp.ne.s32.totalorder %s112, %s126
      %p128 = scmp.eq.s32.totalorder %s34, 0
      %p129 = por %p127, %p128
      %s131 = sadd.s32 %s130, 1
      %p134 = scmp.eq.s32.totalorder %s28, 1
      %p135 = scmp.ne.s32.totalorder %s130, %s132
      %p136 = scmp.eq.s32.totalorder %s28, 0
      %p137 = por %p135, %p136
      %p138 = scmp.ne.s32.totalorder %s130, %s132
      %p139 = scmp.eq.s32.totalorder %s33, 1
      %p140 = por %p138, %p139
      %p141 = scmp.ne.s32.totalorder %s132, %s133
      %p142 = scmp.eq.s32.totalorder %s33, 0
      %p143 = por %p141, %p142
      %p144 = scmp.ne.s32.totalorder %s132, %s133
      %p145 = scmp.eq.s32.totalorder %s34, 1
      %p146 = por %p144, %p145
      %p148 = scmp.ne.s32.totalorder %s133, %s147
      %p149 = scmp.eq.s32.totalorder %s34, 0
      %p150 = por %p148, %p149
      %s152 = sadd.s32 %s151, 1
      %p155 = scmp.eq.s32.totalorder %s28, 1
      %p156 = scmp.ne.s32.totalorder %s151, %s153
      %p157 = scmp.eq.s32.totalorder %s28, 0
      %p158 = por %p156, %p157
      %p159 = scmp.ne.s32.totalorder %s151, %s153
      %p160 = scmp.eq.s32.totalorder %s33, 1
      %p161 = por %p159, %p160
      %p162 = scmp.ne.s32.totalorder %s153, %s154
      %p163 = scmp.eq.s32.totalorder %s33, 0
      %p164 = por %p162, %p163
      %p165 = scmp.ne.s32.totalorder %s153, %s154
      %p166 = scmp.eq.s32.totalorder %s34, 1
      %p167 = por %p165, %p166
      %p169 = scmp.ne.s32.totalorder %s154, %s168
      %p170 = scmp.eq.s32.totalorder %s34, 0
      %p171 = por %p169, %p170
      %s172 = ssub.s32 %s28, %s35
      %p173 = scmp.eq.s32.totalorder %s172, 0
      %s175 = sadd.s32 %s174, 1
      %s176 = scalar_select %p173, %s174, %s175
      %p179 = pneg %p173
      %p180 = scmp.eq.s32.totalorder %s28, 1
      %p181 = por %p179, %p180
      %p182 = scmp.ne.s32.totalorder %s174, %s177
      %p183 = scmp.eq.s32.totalorder %s28, 0
      %p184 = por %p182, %p183
      %p185 = scmp.ne.s32.totalorder %s174, %s177
      %p186 = scmp.eq.s32.totalorder %s33, 1
      %p187 = por %p185, %p186
      %p188 = scmp.ne.s32.totalorder %s177, %s178
      %p189 = scmp.eq.s32.totalorder %s33, 0
      %p190 = por %p188, %p189
      %p191 = scmp.ne.s32.totalorder %s177, %s178
      %p192 = scmp.eq.s32.totalorder %s34, 1
      %p193 = por %p191, %p192
      %p195 = scmp.ne.s32.totalorder %s178, %s194
      %p196 = scmp.eq.s32.totalorder %s34, 0
      %p197 = por %p195, %p196
      %s198 = ssub.s32 %s28, %s35
      %p199 = scmp.eq.s32.totalorder %s198, 0
      %s201 = sadd.s32 %s200, 1
      %s202 = scalar_select %p199, %s200, %s201
      %p205 = pneg %p199
      %p206 = scmp.eq.s32.totalorder %s28, 1
      %p207 = por %p205, %p206
      %p208 = scmp.ne.s32.totalorder %s200, %s203
      %p209 = scmp.eq.s32.totalorder %s28, 0
      %p210 = por %p208, %p209
      %p211 = scmp.ne.s32.totalorder %s200, %s203
      %p212 = scmp.eq.s32.totalorder %s33, 1
      %p213 = por %p211, %p212
      %p214 = scmp.ne.s32.totalorder %s203, %s204
      %p215 = scmp.eq.s32.totalorder %s33, 0
      %p216 = por %p214, %p215
      %p217 = scmp.ne.s32.totalorder %s203, %s204
      %p218 = scmp.eq.s32.totalorder %s34, 1
      %p219 = por %p217, %p218
      %p221 = scmp.ne.s32.totalorder %s204, %s220
      %p222 = scmp.eq.s32.totalorder %s34, 0
      %p223 = por %p221, %p222
      %s224 = ssub.s32 %s28, %s35
      %p225 = scmp.eq.s32.totalorder %s224, 0
      %s227 = sadd.s32 %s226, 1
      %s228 = scalar_select %p225, %s226, %s227
      %p231 = pneg %p225
      %p232 = scmp.eq.s32.totalorder %s28, 1
      %p233 = por %p231, %p232
      %p234 = scmp.ne.s32.totalorder %s226, %s229
      %p235 = scmp.eq.s32.totalorder %s28, 0
      %p236 = por %p234, %p235
      %p237 = scmp.ne.s32.totalorder %s226, %s229
      %p238 = scmp.eq.s32.totalorder %s33, 1
      %p239 = por %p237, %p238
      %p240 = scmp.ne.s32.totalorder %s229, %s230
      %p241 = scmp.eq.s32.totalorder %s33, 0
      %p242 = por %p240, %p241
      %p243 = scmp.ne.s32.totalorder %s229, %s230
      %p244 = scmp.eq.s32.totalorder %s34, 1
      %p245 = por %p243, %p244
      %p247 = scmp.ne.s32.totalorder %s230, %s246
      %p248 = scmp.eq.s32.totalorder %s34, 0
      %p249 = por %p247, %p248
      %p250 = scmp.le.s32.totalorder 1, %s28
      %p251 = scmp.lt.s32.totalorder %s28, 3
      %p252 = pnand %p250, %p251
      %p253 = pneg %p252
      // Predicated region
      $region9: #{tpu_custom_call.1} parent=5 // pred_check
        _
      $region10: #{tpu_custom_call.1} parent=5 // pred_check_branch
        %255 = sbr.rel (%p252) target = $region12
      $region11: #{tpu_custom_call.1} parent=5 // pred_region
        %s256 = ssub.s32 %s28, 1
        // Predicated region
        $region13: #{tpu_custom_call.1} parent=11 // pred_check
          %p257 = pneg %p101
        $region14: #{tpu_custom_call.1} parent=11 // pred_check_branch
          %259 = sbr.rel (%p257) target = $region16
        $region15: #{tpu_custom_call.1} parent=11 // pred_region
          %s261 = ssub.s32 3072, 3072
          %262 = vsyncadd [#allocation6], %s261
          %s263 = sshll.u32 [#allocation7], 4
          %s264 = int_to_ptr.vmem [resolvable:$true] %s263
          %269 = dma.hbm_to_vmem [thread:$0]  %s2, 3072, %s264, [#allocation6], 64, 64, 4
        $region16: #{tpu_custom_call.1} parent=11 // pred_fallthru
          _
        // Predicated region
        $region17: #{tpu_custom_call.1} parent=11 // pred_check
          %p270 = pneg %p122
        $region18: #{tpu_custom_call.1} parent=11 // pred_check_branch
          %272 = sbr.rel (%p270) target = $region20
        $region19: #{tpu_custom_call.1} parent=11 // pred_region
          _
        $region20: #{tpu_custom_call.1} parent=11 // pred_fallthru
          _
        // Predicated region
        $region21: #{tpu_custom_call.1} parent=11 // pred_check
          %p273 = pneg %p143
        $region22: #{tpu_custom_call.1} parent=11 // pred_check_branch
          %275 = sbr.rel (%p273) target = $region24
        $region23: #{tpu_custom_call.1} parent=11 // pred_region
          %s277 = ssub.s32 1024, 1024
          %278 = vsyncadd [#allocation9], %s277
          %s279 = sshll.u32 [#allocation8], 4
          %s280 = int_to_ptr.vmem [resolvable:$true] %s279
          %285 = dma.hbm_to_vmem [thread:$0]  %s4, 1024, %s280, [#allocation9], 64, 64, 4
        $region24: #{tpu_custom_call.1} parent=11 // pred_fallthru
          _
        // Predicated region
        $region25: #{tpu_custom_call.1} parent=11 // pred_check
          %p286 = pneg %p164
        $region26: #{tpu_custom_call.1} parent=11 // pred_check_branch
          %288 = sbr.rel (%p286) target = $region28
        $region27: #{tpu_custom_call.1} parent=11 // pred_region
          _
        $region28: #{tpu_custom_call.1} parent=11 // pred_fallthru
          _
      $region12: #{tpu_custom_call.1} parent=5 // pred_fallthru
        _
      %p289 = scmp.lt.s32.totalorder %s28, 2
      // Predicated region
      $region29: #{tpu_custom_call.1} parent=5 // pred_check
        %p290 = pneg %p289
      $region30: #{tpu_custom_call.1} parent=5 // pred_check_branch
        %292 = sbr.rel (%p290) target = $region32
      $region31: #{tpu_custom_call.1} parent=5 // pred_region
        // Predicated region
        $region33: #{tpu_custom_call.1} parent=31 // pred_check
          %p293 = pneg %p48
        $region34: #{tpu_custom_call.1} parent=31 // pred_check_branch
          %295 = sbr.rel (%p293) target = $region36
        $region35: #{tpu_custom_call.1} parent=31 // pred_region
          %s296 = sand.u32 %s38, 1
          %s297 = scalar_lea.sflag [#allocation3], %s296
          %s298 = sand.u32 %s38, 1
          %s299 = smul.addr %s298, 4
          %s300 = scalar_lea.vmem [#allocation2], %s299
          %s302 = ssub.s32 64, 64
          %303 = vsyncadd %s297, %s302
          %s304 = smul.addr %s28, 64
          %s305 = scalar_lea.hbm %s0, %s304
          %s307 = sshll.u32 %s300, 4
          %s308 = int_to_ptr.vmem [resolvable:$true] %s307
          %310 = dma.hbm_to_vmem [thread:$0]  %s305, 64, %s308, %s297
        $region36: #{tpu_custom_call.1} parent=31 // pred_fallthru
          _
        // Predicated region
        $region37: #{tpu_custom_call.1} parent=31 // pred_check
          %p311 = pneg %p74
        $region38: #{tpu_custom_call.1} parent=31 // pred_check_branch
          %313 = sbr.rel (%p311) target = $region40
        $region39: #{tpu_custom_call.1} parent=31 // pred_region
          %s314 = sand.u32 %s28, 1
          %s315 = scalar_lea.sflag [#allocation6], %s314
          %s316 = sand.u32 %s64, 1
          %s317 = smul.addr %s316, 4
          %s318 = scalar_lea.vmem [#allocation5], %s317
          %s320 = ssub.s32 64, 64
          %321 = vsyncadd %s315, %s320
          %s322 = smul.addr %s28, 64
          %s323 = scalar_lea.hbm %s1, %s322
          %s325 = sshll.u32 %s318, 4
          %s326 = int_to_ptr.vmem [resolvable:$true] %s325
          %328 = dma.hbm_to_vmem [thread:$0]  %s323, 64, %s326, %s315
        $region40: #{tpu_custom_call.1} parent=31 // pred_fallthru
          _
      $region32: #{tpu_custom_call.1} parent=5 // pred_fallthru
        _
      %p329 = scmp.le.s32.totalorder 1, %s28
      %p330 = scmp.lt.s32.totalorder %s28, 3
      %p331 = pnand %p329, %p330
      %p332 = pneg %p331
      // Predicated region
      $region41: #{tpu_custom_call.1} parent=5 // pred_check
        _
      $region42: #{tpu_custom_call.1} parent=5 // pred_check_branch
        %334 = sbr.rel (%p331) target = $region44
      $region43: #{tpu_custom_call.1} parent=5 // pred_region
        %s335 = ssub.s32 %s28, 1
        %s336 = sand.u32 %s41, 1
        %s337 = scalar_lea.sflag [#allocation3], %s336
        %s338 = sand.u32 %s41, 1
        %s339 = smul.addr %s338, 4
        %s340 = scalar_lea.vmem [#allocation2], %s339
        // Predicated region
        $region45: #{tpu_custom_call.1} parent=43 // pred_check
          %p341 = pneg %p54
        $region46: #{tpu_custom_call.1} parent=43 // pred_check_branch
          %343 = sbr.rel (%p341) target = $region48
        $region47: #{tpu_custom_call.1} parent=43 // pred_region
          %344 = dma.done %s337, 64
        $region48: #{tpu_custom_call.1} parent=43 // pred_fallthru
          _
        %s345 = sand.u32 %s33, 1
        %s346 = scalar_lea.sflag [#allocation6], %s345
        %s347 = sand.u32 %s67, 1
        %s348 = smul.addr %s347, 4
        %s349 = scalar_lea.vmem [#allocation5], %s348
        // Predicated region
        $region49: #{tpu_custom_call.1} parent=43 // pred_check
          %p350 = pneg %p80
        $region50: #{tpu_custom_call.1} parent=43 // pred_check_branch
          %352 = sbr.rel (%p350) target = $region52
        $region51: #{tpu_custom_call.1} parent=43 // pred_region
          %353 = dma.done %s346, 64
        $region52: #{tpu_custom_call.1} parent=43 // pred_fallthru
          _
        // Predicated region
        $region53: #{tpu_custom_call.1} parent=43 // pred_check
          %p354 = pneg %p101
        $region54: #{tpu_custom_call.1} parent=43 // pred_check_branch
          %356 = sbr.rel (%p354) target = $region56
        $region55: #{tpu_custom_call.1} parent=43 // pred_region
          %357 = dma.done [#allocation6], 3072
        $region56: #{tpu_custom_call.1} parent=43 // pred_fallthru
          _
        // Predicated region
        $region57: #{tpu_custom_call.1} parent=43 // pred_check
          %p358 = pneg %p143
        $region58: #{tpu_custom_call.1} parent=43 // pred_check_branch
          %360 = sbr.rel (%p358) target = $region60
        $region59: #{tpu_custom_call.1} parent=43 // pred_region
          %361 = dma.done [#allocation9], 1024
        $region60: #{tpu_custom_call.1} parent=43 // pred_fallthru
          _
        %s362 = sand.u32 %s41, 1
        %s363 = scalar_lea.sflag [#allocation3], %s362
        %s364 = sand.u32 %s41, 1
        %s365 = smul.addr %s364, 4
        %s366 = scalar_lea.vmem [#allocation2], %s365
        %p367 = pneg %p54
        %p368 = pneg %p51
        %s369 = sand.u32 %s33, 1
        %s370 = scalar_lea.sflag [#allocation6], %s369
        %s371 = sand.u32 %s67, 1
        %s372 = smul.addr %s371, 4
        %s373 = scalar_lea.vmem [#allocation5], %s372
        %p374 = pneg %p80
        %p375 = pneg %p77
        %p376 = pneg %p101
        %p377 = pneg %p98
        %p378 = pneg %p122
        %p379 = pneg %p119
        %p380 = pneg %p143
        %p381 = pneg %p140
        %p382 = pneg %p164
        %p383 = pneg %p161
        %p384 = pneg %p190
        %p385 = pneg %p187
        %s386 = sand.u32 %s177, 1
        %s387 = scalar_lea.sflag [#allocation4], %s386
        %s388 = sand.u32 %s177, 1
        %s389 = smul.addr %s388, 4
        %s390 = scalar_lea.vmem [#allocation10], %s389
        %p391 = pneg %p216
        %p392 = pneg %p213
        %s393 = sand.u32 %s33, 1
        %s394 = scalar_lea.sflag [#allocation12], %s393
        %s395 = sand.u32 %s203, 1
        %s396 = smul.addr %s395, 4
        %s397 = scalar_lea.vmem [#allocation11], %s396
        %p398 = pneg %p242
        %p399 = pneg %p239
        %s400 = sand.u32 %s33, 1
        %s401 = scalar_lea.sflag [#allocation12], %s400
        %s402 = sand.u32 %s229, 1
        %s403 = smul.addr %s402, 2
        %s404 = scalar_lea.vmem [#allocation13], %s403
        %v406 = vld [vmem:[%s340] sm:$0xf]
        %v407 = vld [vmem:[%s349] sm:$0xf]
        %s408 = scalar_lea.vmem [#allocation7], 64
        %v409 = vld [vmem:[%s408] sm:$0xf]
        %v410 = vld [vmem:[%s408 + $0x4] sm:$0xf]
        %v411 = vld [vmem:[%s408 + $0x8] sm:$0xf]
        %v412 = vld [vmem:[%s408 + $0xc] sm:$0xf]
        %v413 = vld [vmem:[%s408 + $0x10] sm:$0xf]
        %v414 = vld [vmem:[%s408 + $0x14] sm:$0xf]
        %v415 = vld [vmem:[%s408 + $0x18] sm:$0xf]
        %v416 = vld [vmem:[%s408 + $0x1c] sm:$0xf]
        %v417 = vld [vmem:[%s408 + $0x20] sm:$0xf]
        %v418 = vld [vmem:[%s408 + $0x24] sm:$0xf]
        %v419 = vld [vmem:[%s408 + $0x28] sm:$0xf]
        %v420 = vld [vmem:[%s408 + $0x2c] sm:$0xf]
        %v421 = vld [vmem:[%s408 + $0x30] sm:$0xf]
        %v422 = vld [vmem:[%s408 + $0x34] sm:$0xf]
        %v423 = vld [vmem:[%s408 + $0x38] sm:$0xf]
        %v424 = vld [vmem:[%s408 + $0x3c] sm:$0xf]
        %v441 = vunpack.c.l.b16 %v409
        %v442 = vunpack.c.l.b16 %v410
        %v443 = vunpack.c.l.b16 %v411
        %v444 = vunpack.c.l.b16 %v412
        %v445 = vunpack.c.l.b16 %v413
        %v446 = vunpack.c.l.b16 %v414
        %v447 = vunpack.c.l.b16 %v415
        %v448 = vunpack.c.l.b16 %v416
        %v449 = vunpack.c.l.b16 %v417
        %v450 = vunpack.c.l.b16 %v418
        %v451 = vunpack.c.l.b16 %v419
        %v452 = vunpack.c.l.b16 %v420
        %v453 = vunpack.c.l.b16 %v421
        %v454 = vunpack.c.l.b16 %v422
        %v455 = vunpack.c.l.b16 %v423
        %v456 = vunpack.c.l.b16 %v424
        %v457 = vpack.c.b16 %v442, %v441
        %v458 = vpack.c.b16 %v444, %v443
        %v459 = vpack.c.b16 %v446, %v445
        %v460 = vpack.c.b16 %v448, %v447
        %v461 = vpack.c.b16 %v450, %v449
        %v462 = vpack.c.b16 %v452, %v451
        %v463 = vpack.c.b16 %v454, %v453
        %v464 = vpack.c.b16 %v456, %v455
        %473 = vmatprep.subr.bf16.mxu0 0
        %474 = vmatpush1.bf16.msra.mxu0 %v464
        %475 = vmatprep.subr.bf16.mxu0 0
        %476 = vmatpush1.bf16.msra.mxu0 %v463
        %477 = vmatprep.subr.bf16.mxu0 0
        %478 = vmatpush1.bf16.msra.mxu0 %v462
        %479 = vmatprep.subr.bf16.mxu0 0
        %480 = vmatpush1.bf16.msra.mxu0 %v461
        %481 = vmatprep.subr.bf16.mxu0 0
        %482 = vmatpush1.bf16.msra.mxu0 %v460
        %483 = vmatprep.subr.bf16.mxu0 0
        %484 = vmatpush1.bf16.msra.mxu0 %v459
        %485 = vmatprep.subr.bf16.mxu0 0
        %486 = vmatpush1.bf16.msra.mxu0 %v458
        %487 = vmatprep.subr.bf16.mxu0 0
        %488 = vmatpush1.bf16.msra.mxu0 %v457
        %489 = vmatprep.subr.bf16.mxu0 0
        %490 = vmatpush2.bf16.msra.mxu0 0
        %491 = vmatprep.subr.bf16.mxu0 0
        %492 = vmatpush2.bf16.msra.mxu0 0
        %493 = vmatprep.subr.bf16.mxu0 0
        %494 = vmatpush2.bf16.msra.mxu0 0
        %495 = vmatprep.subr.bf16.mxu0 0
        %496 = vmatpush2.bf16.msra.mxu0 0
        %497 = vmatprep.subr.bf16.mxu0 0
        %498 = vmatpush2.bf16.msra.mxu0 0
        %499 = vmatprep.subr.bf16.mxu0 0
        %500 = vmatpush2.bf16.msra.mxu0 0
        %501 = vmatprep.subr.bf16.mxu0 0
        %502 = vmatpush2.bf16.msra.mxu0 0
        %503 = vmatprep.subr.bf16.mxu0 0
        %504 = vmatpush2.bf16.msra.mxu0 0
        %505 = vmatprep.mubr.bf16.mxu0 0
        %506 = vmatmul.mubr.bf16.gmra.mxu0 %v406
        %v507 = vpop.f32.mrf.mxu0
        %v508 = vadd.f32 0.0, %v507
        %v509 = vpop.f32.mrf.mxu0
        %v510 = vpop.f32.mrf.mxu0
        %v511 = vpop.f32.mrf.mxu0
        %512 = vdwg.mxu0
        %s513 = scalar_lea.vmem [#allocation7], 128
        %v514 = vld [vmem:[%s513] sm:$0xf]
        %v515 = vld [vmem:[%s513 + $0x4] sm:$0xf]
        %v516 = vld [vmem:[%s513 + $0x8] sm:$0xf]
        %v517 = vld [vmem:[%s513 + $0xc] sm:$0xf]
        %v518 = vld [vmem:[%s513 + $0x10] sm:$0xf]
        %v519 = vld [vmem:[%s513 + $0x14] sm:$0xf]
        %v520 = vld [vmem:[%s513 + $0x18] sm:$0xf]
        %v521 = vld [vmem:[%s513 + $0x1c] sm:$0xf]
        %v522 = vld [vmem:[%s513 + $0x20] sm:$0xf]
        %v523 = vld [vmem:[%s513 + $0x24] sm:$0xf]
        %v524 = vld [vmem:[%s513 + $0x28] sm:$0xf]
        %v525 = vld [vmem:[%s513 + $0x2c] sm:$0xf]
        %v526 = vld [vmem:[%s513 + $0x30] sm:$0xf]
        %v527 = vld [vmem:[%s513 + $0x34] sm:$0xf]
        %v528 = vld [vmem:[%s513 + $0x38] sm:$0xf]
        %v529 = vld [vmem:[%s513 + $0x3c] sm:$0xf]
        %v546 = vunpack.c.l.b16 %v514
        %v547 = vunpack.c.l.b16 %v515
        %v548 = vunpack.c.l.b16 %v516
        %v549 = vunpack.c.l.b16 %v517
        %v550 = vunpack.c.l.b16 %v518
        %v551 = vunpack.c.l.b16 %v519
        %v552 = vunpack.c.l.b16 %v520
        %v553 = vunpack.c.l.b16 %v521
        %v554 = vunpack.c.l.b16 %v522
        %v555 = vunpack.c.l.b16 %v523
        %v556 = vunpack.c.l.b16 %v524
        %v557 = vunpack.c.l.b16 %v525
        %v558 = vunpack.c.l.b16 %v526
        %v559 = vunpack.c.l.b16 %v527
        %v560 = vunpack.c.l.b16 %v528
        %v561 = vunpack.c.l.b16 %v529
        %v562 = vpack.c.b16 %v547, %v546
        %v563 = vpack.c.b16 %v549, %v548
        %v564 = vpack.c.b16 %v551, %v550
        %v565 = vpack.c.b16 %v553, %v552
        %v566 = vpack.c.b16 %v555, %v554
        %v567 = vpack.c.b16 %v557, %v556
        %v568 = vpack.c.b16 %v559, %v558
        %v569 = vpack.c.b16 %v561, %v560
        %578 = vmatprep.subr.bf16.mxu0 0
        %579 = vmatpush1.bf16.msra.mxu0 %v569
        %580 = vmatprep.subr.bf16.mxu0 0
        %581 = vmatpush1.bf16.msra.mxu0 %v568
        %582 = vmatprep.subr.bf16.mxu0 0
        %583 = vmatpush1.bf16.msra.mxu0 %v567
        %584 = vmatprep.subr.bf16.mxu0 0
        %585 = vmatpush1.bf16.msra.mxu0 %v566
        %586 = vmatprep.subr.bf16.mxu0 0
        %587 = vmatpush1.bf16.msra.mxu0 %v565
        %588 = vmatprep.subr.bf16.mxu0 0
        %589 = vmatpush1.bf16.msra.mxu0 %v564
        %590 = vmatprep.subr.bf16.mxu0 0
        %591 = vmatpush1.bf16.msra.mxu0 %v563
        %592 = vmatprep.subr.bf16.mxu0 0
        %593 = vmatpush1.bf16.msra.mxu0 %v562
        %594 = vmatprep.subr.bf16.mxu0 0
        %595 = vmatpush2.bf16.msra.mxu0 0
        %596 = vmatprep.subr.bf16.mxu0 0
        %597 = vmatpush2.bf16.msra.mxu0 0
        %598 = vmatprep.subr.bf16.mxu0 0
        %599 = vmatpush2.bf16.msra.mxu0 0
        %600 = vmatprep.subr.bf16.mxu0 0
        %601 = vmatpush2.bf16.msra.mxu0 0
        %602 = vmatprep.subr.bf16.mxu0 0
        %603 = vmatpush2.bf16.msra.mxu0 0
        %604 = vmatprep.subr.bf16.mxu0 0
        %605 = vmatpush2.bf16.msra.mxu0 0
        %606 = vmatprep.subr.bf16.mxu0 0
        %607 = vmatpush2.bf16.msra.mxu0 0
        %608 = vmatprep.subr.bf16.mxu0 0
        %609 = vmatpush2.bf16.msra.mxu0 0
        %610 = vmatprep.mubr.bf16.mxu0 0
        %611 = vmatmul.mubr.bf16.gmra.mxu0 %v407
        %v612 = vpop.f32.mrf.mxu0
        %v613 = vadd.f32 0.0, %v612
        %v614 = vpop.f32.mrf.mxu0
        %v615 = vpop.f32.mrf.mxu0
        %v616 = vpop.f32.mrf.mxu0
        %617 = vdwg.mxu0
        %v618 = vadd.f32 %v508, %v613
        %v620 = vunpack.c.l.b16 %v407
        %v621 = vpack.c.b16 %v620, %v620
        %v623 = vshrl.u32 %v621, 16
        %v625 = vrot.slane %v623, 7
        %v626 = vshll.u32 %v621, 16
        %v628 = vor.u32 %v625, %v626
        %vm630 = vcmask 1040384
        %vm631 = vsmask.f32 256
        %vm632 = vmand %vm630, %vm631
        %v633 = vsel %vm632, 0, %v628
        %v634 = vld [vmem:[#allocation7] sm:$0xf]
        %v635 = vld [vmem:[#allocation7 + $0x4] sm:$0xf]
        %v636 = vld [vmem:[#allocation7 + $0x8] sm:$0xf]
        %v637 = vld [vmem:[#allocation7 + $0xc] sm:$0xf]
        %v638 = vld [vmem:[#allocation7 + $0x10] sm:$0xf]
        %v639 = vld [vmem:[#allocation7 + $0x14] sm:$0xf]
        %v640 = vld [vmem:[#allocation7 + $0x18] sm:$0xf]
        %v641 = vld [vmem:[#allocation7 + $0x1c] sm:$0xf]
        %v642 = vld [vmem:[#allocation7 + $0x20] sm:$0xf]
        %v643 = vld [vmem:[#allocation7 + $0x24] sm:$0xf]
        %v644 = vld [vmem:[#allocation7 + $0x28] sm:$0xf]
        %v645 = vld [vmem:[#allocation7 + $0x2c] sm:$0xf]
        %v646 = vld [vmem:[#allocation7 + $0x30] sm:$0xf]
        %v647 = vld [vmem:[#allocation7 + $0x34] sm:$0xf]
        %v648 = vld [vmem:[#allocation7 + $0x38] sm:$0xf]
        %v649 = vld [vmem:[#allocation7 + $0x3c] sm:$0xf]
        %v666 = vunpack.c.l.b16 %v634
        %v667 = vunpack.c.l.b16 %v635
        %v668 = vunpack.c.l.b16 %v636
        %v669 = vunpack.c.l.b16 %v637
        %v670 = vunpack.c.l.b16 %v638
        %v671 = vunpack.c.l.b16 %v639
        %v672 = vunpack.c.l.b16 %v640
        %v673 = vunpack.c.l.b16 %v641
        %v674 = vunpack.c.l.b16 %v642
        %v675 = vunpack.c.l.b16 %v643
        %v676 = vunpack.c.l.b16 %v644
        %v677 = vunpack.c.l.b16 %v645
        %v678 = vunpack.c.l.b16 %v646
        %v679 = vunpack.c.l.b16 %v647
        %v680 = vunpack.c.l.b16 %v648
        %v681 = vunpack.c.l.b16 %v649
        %v682 = vpack.c.b16 %v667, %v666
        %v683 = vpack.c.b16 %v669, %v668
        %v684 = vpack.c.b16 %v671, %v670
        %v685 = vpack.c.b16 %v673, %v672
        %v686 = vpack.c.b16 %v675, %v674
        %v687 = vpack.c.b16 %v677, %v676
        %v688 = vpack.c.b16 %v679, %v678
        %v689 = vpack.c.b16 %v681, %v680
        %698 = vmatprep.subr.bf16.mxu0 0
        %699 = vmatpush1.bf16.msra.mxu0 %v689
        %700 = vmatprep.subr.bf16.mxu0 0
        %701 = vmatpush1.bf16.msra.mxu0 %v688
        %702 = vmatprep.subr.bf16.mxu0 0
        %703 = vmatpush1.bf16.msra.mxu0 %v687
        %704 = vmatprep.subr.bf16.mxu0 0
        %705 = vmatpush1.bf16.msra.mxu0 %v686
        %706 = vmatprep.subr.bf16.mxu0 0
        %707 = vmatpush1.bf16.msra.mxu0 %v685
        %708 = vmatprep.subr.bf16.mxu0 0
        %709 = vmatpush1.bf16.msra.mxu0 %v684
        %710 = vmatprep.subr.bf16.mxu0 0
        %711 = vmatpush1.bf16.msra.mxu0 %v683
        %712 = vmatprep.subr.bf16.mxu0 0
        %713 = vmatpush1.bf16.msra.mxu0 %v682
        %714 = vmatprep.subr.bf16.mxu0 0
        %715 = vmatpush2.bf16.msra.mxu0 0
        %716 = vmatprep.subr.bf16.mxu0 0
        %717 = vmatpush2.bf16.msra.mxu0 0
        %718 = vmatprep.subr.bf16.mxu0 0
        %719 = vmatpush2.bf16.msra.mxu0 0
        %720 = vmatprep.subr.bf16.mxu0 0
        %721 = vmatpush2.bf16.msra.mxu0 0
        %722 = vmatprep.subr.bf16.mxu0 0
        %723 = vmatpush2.bf16.msra.mxu0 0
        %724 = vmatprep.subr.bf16.mxu0 0
        %725 = vmatpush2.bf16.msra.mxu0 0
        %726 = vmatprep.subr.bf16.mxu0 0
        %727 = vmatpush2.bf16.msra.mxu0 0
        %728 = vmatprep.subr.bf16.mxu0 0
        %729 = vmatpush2.bf16.msra.mxu0 0
        %730 = vmatprep.mubr.bf16.mxu0 0
        %731 = vmatmul.mubr.bf16.gmra.mxu0 %v633
        %v732 = vpop.f32.mrf.mxu0
        %v733 = vadd.f32 0.0, %v732
        %v734 = vpop.f32.mrf.mxu0
        %v735 = vpop.f32.mrf.mxu0
        %v736 = vpop.f32.mrf.mxu0
        %737 = vdwg.mxu0
        %v738 = vadd.f32 %v618, %v733
        %v739 = vld [vmem:[%s3] sm:$0x1]
        %v741 = vlaneseq
        %v742 = vshrl.u32 %v741, 7
        %v743 = vsub.s32 0, %v742
        %v744 = vrot.slane %v739, %v743
        %v746 = vadd.f32 %v738, %v744
        %v747 = vrot.slane %v746, 4
        %v748 = vadd.f32 %v746, %v747
        %v749 = vrot.slane %v748, 2
        %v750 = vadd.f32 %v748, %v749
        %v751 = vrot.slane %v750, 1
        %v752 = vadd.f32 %v750, %v751
        %v753 = vmul.f32 %v746, %v746
        %v754 = vrot.slane %v753, 4
        %v755 = vadd.f32 %v753, %v754
        %v756 = vrot.slane %v755, 2
        %v757 = vadd.f32 %v755, %v756
        %v758 = vrot.slane %v757, 1
        %v759 = vadd.f32 %v757, %v758
        %vm760 = vcmask 1040384
        %v761 = vsel %vm760, %v752, %v759
        %762 = vst [vmem:[%s404] sm:$0x3] %v761
        %v763 = vpack.c.bf16 %v746, %v746
        %764 = vst [vmem:[%s390] sm:$0xf] %v763
        %v765 = vld [vmem:[#allocation8] sm:$0xf]
        %v766 = vld [vmem:[#allocation8 + $0x4] sm:$0xf]
        %v767 = vld [vmem:[#allocation8 + $0x8] sm:$0xf]
        %v768 = vld [vmem:[#allocation8 + $0xc] sm:$0xf]
        %v769 = vld [vmem:[#allocation8 + $0x10] sm:$0xf]
        %v770 = vld [vmem:[#allocation8 + $0x14] sm:$0xf]
        %v771 = vld [vmem:[#allocation8 + $0x18] sm:$0xf]
        %v772 = vld [vmem:[#allocation8 + $0x1c] sm:$0xf]
        %v773 = vld [vmem:[#allocation8 + $0x20] sm:$0xf]
        %v774 = vld [vmem:[#allocation8 + $0x24] sm:$0xf]
        %v775 = vld [vmem:[#allocation8 + $0x28] sm:$0xf]
        %v776 = vld [vmem:[#allocation8 + $0x2c] sm:$0xf]
        %v777 = vld [vmem:[#allocation8 + $0x30] sm:$0xf]
        %v778 = vld [vmem:[#allocation8 + $0x34] sm:$0xf]
        %v779 = vld [vmem:[#allocation8 + $0x38] sm:$0xf]
        %v780 = vld [vmem:[#allocation8 + $0x3c] sm:$0xf]
        %v797 = vunpack.c.l.b16 %v765
        %v798 = vunpack.c.l.b16 %v766
        %v799 = vunpack.c.l.b16 %v767
        %v800 = vunpack.c.l.b16 %v768
        %v801 = vunpack.c.l.b16 %v769
        %v802 = vunpack.c.l.b16 %v770
        %v803 = vunpack.c.l.b16 %v771
        %v804 = vunpack.c.l.b16 %v772
        %v805 = vunpack.c.l.b16 %v773
        %v806 = vunpack.c.l.b16 %v774
        %v807 = vunpack.c.l.b16 %v775
        %v808 = vunpack.c.l.b16 %v776
        %v809 = vunpack.c.l.b16 %v777
        %v810 = vunpack.c.l.b16 %v778
        %v811 = vunpack.c.l.b16 %v779
        %v812 = vunpack.c.l.b16 %v780
        %v813 = vpack.c.b16 %v798, %v797
        %v814 = vpack.c.b16 %v800, %v799
        %v815 = vpack.c.b16 %v802, %v801
        %v816 = vpack.c.b16 %v804, %v803
        %v817 = vpack.c.b16 %v806, %v805
        %v818 = vpack.c.b16 %v808, %v807
        %v819 = vpack.c.b16 %v810, %v809
        %v820 = vpack.c.b16 %v812, %v811
        %829 = vmatprep.subr.bf16.mxu0 0
        %830 = vmatpush1.bf16.msra.mxu0 %v820
        %831 = vmatprep.subr.bf16.mxu0 0
        %832 = vmatpush1.bf16.msra.mxu0 %v819
        %833 = vmatprep.subr.bf16.mxu0 0
        %834 = vmatpush1.bf16.msra.mxu0 %v818
        %835 = vmatprep.subr.bf16.mxu0 0
        %836 = vmatpush1.bf16.msra.mxu0 %v817
        %837 = vmatprep.subr.bf16.mxu0 0
        %838 = vmatpush1.bf16.msra.mxu0 %v816
        %839 = vmatprep.subr.bf16.mxu0 0
        %840 = vmatpush1.bf16.msra.mxu0 %v815
        %841 = vmatprep.subr.bf16.mxu0 0
        %842 = vmatpush1.bf16.msra.mxu0 %v814
        %843 = vmatprep.subr.bf16.mxu0 0
        %844 = vmatpush1.bf16.msra.mxu0 %v813
        %845 = vmatprep.subr.bf16.mxu0 0
        %846 = vmatpush2.bf16.msra.mxu0 0
        %847 = vmatprep.subr.bf16.mxu0 0
        %848 = vmatpush2.bf16.msra.mxu0 0
        %849 = vmatprep.subr.bf16.mxu0 0
        %850 = vmatpush2.bf16.msra.mxu0 0
        %851 = vmatprep.subr.bf16.mxu0 0
        %852 = vmatpush2.bf16.msra.mxu0 0
        %853 = vmatprep.subr.bf16.mxu0 0
        %854 = vmatpush2.bf16.msra.mxu0 0
        %855 = vmatprep.subr.bf16.mxu0 0
        %856 = vmatpush2.bf16.msra.mxu0 0
        %857 = vmatprep.subr.bf16.mxu0 0
        %858 = vmatpush2.bf16.msra.mxu0 0
        %859 = vmatprep.subr.bf16.mxu0 0
        %860 = vmatpush2.bf16.msra.mxu0 0
        %861 = vmatprep.mubr.bf16.mxu0 0
        %862 = vmatmul.mubr.bf16.gmra.mxu0 %v406
        %v863 = vpop.f32.mrf.mxu0
        %v864 = vadd.f32 0.0, %v863
        %v865 = vpop.f32.mrf.mxu0
        %v866 = vpop.f32.mrf.mxu0
        %v867 = vpop.f32.mrf.mxu0
        %868 = vdwg.mxu0
        %v869 = vld [vmem:[%s5] sm:$0x1]
        %v871 = vlaneseq
        %v872 = vshrl.u32 %v871, 7
        %v873 = vsub.s32 0, %v872
        %v874 = vrot.slane %v869, %v873
        %v876 = vadd.f32 %v864, %v874
        %v877 = vpack.c.bf16 %v876, %v876
        %878 = vst [vmem:[%s397] sm:$0xf] %v877
        %s879 = sand.u32 %s177, 1
        %s880 = scalar_lea.sflag [#allocation4], %s879
        %s881 = sand.u32 %s177, 1
        %s882 = smul.addr %s881, 4
        %s883 = scalar_lea.vmem [#allocation10], %s882
        %s884 = sand.u32 %s33, 1
        %s885 = scalar_lea.sflag [#allocation12], %s884
        %s886 = sand.u32 %s203, 1
        %s887 = smul.addr %s886, 4
        %s888 = scalar_lea.vmem [#allocation11], %s887
        %s889 = sand.u32 %s33, 1
        %s890 = scalar_lea.sflag [#allocation12], %s889
        %s891 = sand.u32 %s229, 1
        %s892 = smul.addr %s891, 2
        %s893 = scalar_lea.vmem [#allocation13], %s892
        // Predicated region
        $region61: #{tpu_custom_call.1} parent=43 // pred_check
          %p894 = pneg %p187
        $region62: #{tpu_custom_call.1} parent=43 // pred_check_branch
          %896 = sbr.rel (%p894) target = $region64
        $region63: #{tpu_custom_call.1} parent=43 // pred_region
          %s898 = ssub.s32 64, 64
          %899 = vsyncadd %s880, %s898
          %s900 = smul.addr %s33, 64
          %s901 = scalar_lea.hbm %s6, %s900
          %s903 = sshll.u32 %s883, 4
          %s904 = int_to_ptr.vmem [resolvable:$true] %s903
          %906 = dma.vmem_to_hbm [thread:$0]  %s904, 64, %s901, %s880
        $region64: #{tpu_custom_call.1} parent=43 // pred_fallthru
          _
        // Predicated region
        $region65: #{tpu_custom_call.1} parent=43 // pred_check
          %p907 = pneg %p213
        $region66: #{tpu_custom_call.1} parent=43 // pred_check_branch
          %909 = sbr.rel (%p907) target = $region68
        $region67: #{tpu_custom_call.1} parent=43 // pred_region
          %s911 = ssub.s32 64, 64
          %912 = vsyncadd %s885, %s911
          %s913 = smul.addr %s33, 64
          %s914 = scalar_lea.hbm %s7, %s913
          %s916 = sshll.u32 %s888, 4
          %s917 = int_to_ptr.vmem [resolvable:$true] %s916
          %919 = dma.vmem_to_hbm [thread:$0]  %s917, 64, %s914, %s885
        $region68: #{tpu_custom_call.1} parent=43 // pred_fallthru
          _
        // Predicated region
        $region69: #{tpu_custom_call.1} parent=43 // pred_check
          %p920 = pneg %p239
        $region70: #{tpu_custom_call.1} parent=43 // pred_check_branch
          %922 = sbr.rel (%p920) target = $region72
        $region71: #{tpu_custom_call.1} parent=43 // pred_region
          %s924 = ssub.s32 32, 32
          %925 = vsyncadd %s890, %s924
          %s926 = smul.addr %s33, 32
          %s927 = scalar_lea.hbm %s8, %s926
          %s929 = sshll.u32 %s893, 4
          %s930 = int_to_ptr.vmem [resolvable:$true] %s929
          %932 = dma.vmem_to_hbm [thread:$0]  %s930, 32, %s927, %s890
        $region72: #{tpu_custom_call.1} parent=43 // pred_fallthru
          _
      $region44: #{tpu_custom_call.1} parent=5 // pred_fallthru
        _
      %p933 = scmp.le.s32.totalorder 2, %s28
      // Predicated region
      $region73: #{tpu_custom_call.1} parent=5 // pred_check
        %p934 = pneg %p933
      $region74: #{tpu_custom_call.1} parent=5 // pred_check_branch
        %936 = sbr.rel (%p934) target = $region76
      $region75: #{tpu_custom_call.1} parent=5 // pred_region
        %s937 = ssub.s32 %s28, 2
        // Predicated region
        $region77: #{tpu_custom_call.1} parent=75 // pred_check
          %p938 = pneg %p193
        $region78: #{tpu_custom_call.1} parent=75 // pred_check_branch
          %940 = sbr.rel (%p938) target = $region80
        $region79: #{tpu_custom_call.1} parent=75 // pred_region
          %s941 = sand.u32 %s178, 1
          %s942 = scalar_lea.sflag [#allocation4], %s941
          %s943 = sand.u32 %s178, 1
          %s944 = smul.addr %s943, 4
          %s945 = scalar_lea.vmem [#allocation10], %s944
          %946 = dma.done %s942, 64
        $region80: #{tpu_custom_call.1} parent=75 // pred_fallthru
          _
        // Predicated region
        $region81: #{tpu_custom_call.1} parent=75 // pred_check
          %p947 = pneg %p219
        $region82: #{tpu_custom_call.1} parent=75 // pred_check_branch
          %949 = sbr.rel (%p947) target = $region84
        $region83: #{tpu_custom_call.1} parent=75 // pred_region
          %s950 = sand.u32 %s34, 1
          %s951 = scalar_lea.sflag [#allocation12], %s950
          %s952 = sand.u32 %s204, 1
          %s953 = smul.addr %s952, 4
          %s954 = scalar_lea.vmem [#allocation11], %s953
          %955 = dma.done %s951, 64
        $region84: #{tpu_custom_call.1} parent=75 // pred_fallthru
          _
        // Predicated region
        $region85: #{tpu_custom_call.1} parent=75 // pred_check
          %p956 = pneg %p245
        $region86: #{tpu_custom_call.1} parent=75 // pred_check_branch
          %958 = sbr.rel (%p956) target = $region88
        $region87: #{tpu_custom_call.1} parent=75 // pred_region
          %s959 = sand.u32 %s34, 1
          %s960 = scalar_lea.sflag [#allocation12], %s959
          %s961 = sand.u32 %s230, 1
          %s962 = smul.addr %s961, 2
          %s963 = scalar_lea.vmem [#allocation13], %s962
          %964 = dma.done %s960, 32
        $region88: #{tpu_custom_call.1} parent=75 // pred_fallthru
          _
      $region76: #{tpu_custom_call.1} parent=5 // pred_fallthru
        _
    $region6: #{tpu_custom_call.1} parent=1 // loop_footer
      %s32 = sadd.s32 1, %s28
    $region7: #{tpu_custom_call.1} parent=1 // loop_footer_branch
      %27 = sbr.rel target = $region3
    $region8: #{tpu_custom_call.1} parent=1 // loop_exit
      _
    %965 = vsyncpa [#allocation3], 1
    %s966 = scalar_lea.sflag [#allocation3], 1
    %967 = vsyncpa %s966, 1
    %968 = vsyncpa [#allocation6], 1
    %s969 = scalar_lea.sflag [#allocation6], 1
    %970 = vsyncpa %s969, 1
    %971 = vsyncpa [#allocation9], 1
    %972 = vsyncpa [#allocation4], 1
    %s973 = scalar_lea.sflag [#allocation4], 1
    %974 = vsyncpa %s973, 1
    %975 = vsyncpa [#allocation12], 1
    %s976 = scalar_lea.sflag [#allocation12], 1
    %977 = vsyncpa %s976, 1

</llo_original>
